<compile_context>
chip_gen: v5e
topology: v5e:2x2
jax: 0.10.0
libtpu: 0.0.40
codegen_flags: <defaults>
</compile_context>

<pallas_src>
import functools

import jax
import jax.numpy as jnp
from jax.experimental import pallas as pl
from jax.experimental.pallas import tpu as pltpu


def _rbf_kernel(edge_ref, center_ref, o_ref, *, K, P):
    """Expand per-edge scalars across the K centers and take one exp.

    edge_ref:   (rows, 2P) f32; [:, :P] = base (log cutoff term, -inf outside
                cutoff), [:, P:] = sqrt(width) * exp(-alpha * r)
    center_ref: (1, P*K)  f32; sqrt(width) * center, tiled P times along lanes
    o_ref:      (rows, P*K) packed output block (lane-dense)
    """
    L = P * K
    x = edge_ref[...]                                   # (rows, 2P)
    base_p = x[:, 0:P]
    e_p = x[:, P:2 * P]
    c = center_ref[...]                                 # (1, L)

    if P == 1:
        base = base_p                                   # (rows, 1) broadcasts vs (1, K)
        e = e_p
    else:
        rows = x.shape[0]
        lane = jax.lax.broadcasted_iota(jnp.int32, (rows, L), 1)
        base = jnp.broadcast_to(base_p[:, 0:1], (rows, L))
        e = jnp.broadcast_to(e_p[:, 0:1], (rows, L))
        for j in range(1, P):
            sel = lane >= j * K                         # constant mask per j
            base = jnp.where(sel, jnp.broadcast_to(base_p[:, j:j + 1], (rows, L)), base)
            e = jnp.where(sel, jnp.broadcast_to(e_p[:, j:j + 1], (rows, L)), e)

    d = e - c
    o_ref[...] = jnp.exp(base - d * d).astype(o_ref.dtype)


def exp_gaussian_rbf(r, center, alpha_raw, *, cutoff, width,
                     edges_per_step=16384, out_dtype=jnp.float32):
    """Exponential-Gaussian RBF expansion.

    r:         (N,) or (N, 1) edge distances (float)
    center:    (K,) Gaussian centers (linspace(1, 0, K))
    alpha_raw: scalar trainable parameter `_alpha` (pre-softplus)
    Returns (N, K) in `out_dtype` (float32 default; bf16 halves HBM writes,
    which is the dominant traffic — recommended on v5e when downstream allows).
    """
    r = jnp.asarray(r, jnp.float32).reshape(-1)
    N = r.shape[0]
    center = jnp.asarray(center, jnp.float32).reshape(-1)
    K = center.shape[0]

    cutoff = float(cutoff)
    width = float(width)
    sqrt_w = width ** 0.5

    # Lane packing factor: P edges side by side -> lane width P*K (128 when K=64).
    P = (128 // K) if (K <= 128 and 128 % K == 0) else 1
    L = P * K

    # Pad N up to a multiple of P with r > cutoff (exact zeros, sliced off later).
    N_pad = ((N + P - 1) // P) * P
    if N_pad != N:
        r = jnp.concatenate([r, jnp.full((N_pad - N,), 2.0 * cutoff, jnp.float32)])
    n_rows = N_pad // P

    # ---- lane-dense per-edge prologue (tiny XLA pass; ~8 B/edge extra HBM) ----
    alpha = jax.nn.softplus(jnp.asarray(alpha_raw, jnp.float32))
    in_range = r < cutoff
    r_safe = jnp.where(in_range, r, 0.0)
    denom = (cutoff - r_safe) * (cutoff + r_safe)          # > 0 on the safe branch
    base = jnp.where(in_range, -(r_safe * r_safe) / denom, -jnp.inf)  # log cutoff fn
    e_s = sqrt_w * jnp.exp(-alpha * r)                      # sqrt(w) * exp(-alpha r)
    per_edge = jnp.concatenate([base.reshape(n_rows, P),
                                e_s.reshape(n_rows, P)], axis=1)      # (n_rows, 2P)
    center_s = sqrt_w * jnp.tile(center.reshape(1, K), (1, P))        # (1, L)

    # ---- tile sizing / VMEM budget ----
    out_bytes = jnp.dtype(out_dtype).itemsize
    in_lanes = max(128, ((2 * P + 127) // 128) * 128)   # narrow block pads to 128 lanes
    out_lanes = max(128, L)
    bytes_per_row = 2 * in_lanes * 4 + 2 * out_lanes * out_bytes      # double-buffered
    vmem_budget = 40 << 20                               # safe on v5e/v6e/v7x
    max_rows_vmem = max(8, (vmem_budget // bytes_per_row) // 8 * 8)

    tm2 = min(max(8, edges_per_step // P), n_rows, max_rows_vmem)
    if n_rows > 8:
        # Guarantee >= 2 grid steps so v7x megacore ("parallel") sharding engages.
        half_rows = (((n_rows + 1) // 2) + 7) // 8 * 8
        tm2 = min(tm2, half_rows)
    if tm2 < n_rows:
        tm2 = max(8, (tm2 // 8) * 8)                     # sublane-aligned block
    grid = (pl.cdiv(n_rows, tm2),)                       # partial last block clipped

    vmem_limit = int(min(tm2 * bytes_per_row + (4 << 20), 120 << 20))

    cost = pl.CostEstimate(
        flops=6 * N_pad * K,
        transcendentals=N_pad * K,
        bytes_accessed=N_pad * K * out_bytes + N_pad * 2 * 4 * P // P + N_pad * 4,
    )

    kernel = functools.partial(_rbf_kernel, K=K, P=P)

    out_packed = pl.pallas_call(
        kernel,
        out_shape=jax.ShapeDtypeStruct((n_rows, L), out_dtype),
        grid_spec=pltpu.PrefetchScalarGridSpec(
            num_scalar_prefetch=0,
            grid=grid,
            in_specs=[
                pl.BlockSpec((tm2, 2 * P), lambda i: (i, 0)),   # per-edge scalars
                pl.BlockSpec((1, L), lambda i: (0, 0)),         # scaled centers (resident)
            ],
            out_specs=pl.BlockSpec((tm2, L), lambda i: (i, 0)),
        ),
        compiler_params=pltpu.CompilerParams(
            dimension_semantics=("parallel",),
            vmem_limit_bytes=vmem_limit),
        cost_estimate=cost,
    )(per_edge, center_s)

    # Row-major (n_rows, P*K) is bit-identical to (N_pad, K): free reshape.
    out = out_packed.reshape(N_pad, K)
    if N_pad != N:
        out = out[:N]
    return out


def _reference(r, center, alpha_sp, cutoff, width):
    r = r.reshape(-1, 1).astype(jnp.float32)
    center = center.reshape(1, -1).astype(jnp.float32)
    in_range = r < cutoff
    r_safe = jnp.where(in_range, r, 0.0)
    cut = jnp.where(in_range,
                    jnp.exp(-r_safe ** 2 / ((cutoff - r_safe) * (cutoff + r_safe))),
                    0.0)
    return cut * jnp.exp(-width * (jnp.exp(-alpha_sp * r) - center) ** 2)


if __name__ == "__main__":
    # ---- module hyper-params (mirrors __init__) ----
    num_basis_functions = 64
    cutoff = 6.0
    ini_alpha = 0.5
    width = float(num_basis_functions)

    # buffers / parameter (deterministic init: _alpha = softplus_inverse(ini_alpha))
    center = jnp.linspace(1.0, 0.0, num_basis_functions, dtype=jnp.float32)
    alpha_raw = jnp.log(jnp.expm1(jnp.float32(ini_alpha)))

    # ---- example input: edge distances r of shape (N, 1) ----
    N = 1000
    key = jax.random.PRNGKey(0)
    r = jax.random.uniform(key, (N, 1), dtype=jnp.float32,
                           minval=0.0, maxval=1.2 * cutoff)

    # Default path (>= 2 grid steps even at this size, for v7x megacore).
    out = exp_gaussian_rbf(r, center, alpha_raw, cutoff=cutoff, width=width)
    out = jax.block_until_ready(out)

    # Small-tile path: exercises a multi-step grid and a partial last block.
    out_small = exp_gaussian_rbf(r, center, alpha_raw, cutoff=cutoff, width=width,
                                 edges_per_step=256)
    out_small = jax.block_until_ready(out_small)

    # bf16 output path (HBM-write bound case, recommended on v5e).
    out_bf16 = exp_gaussian_rbf(r, center, alpha_raw, cutoff=cutoff, width=width,
                                out_dtype=jnp.bfloat16)
    out_bf16 = jax.block_until_ready(out_bf16)

    alpha_sp = jax.nn.softplus(alpha_raw)
    ref = _reference(r, center, alpha_sp, jnp.float32(cutoff), jnp.float32(width))

    assert out.shape == (N, num_basis_functions)
    assert jnp.allclose(out, ref, atol=1e-5, rtol=1e-5), "mismatch vs reference (default tile)"
    assert jnp.allclose(out_small, ref, atol=1e-5, rtol=1e-5), "mismatch vs reference (small tile)"
    assert jnp.allclose(out_bf16.astype(jnp.float32), ref, atol=1e-2, rtol=1e-2), \
        "mismatch vs reference (bf16 output)"

    print("KERNEL_OK")
</pallas_src>

<mosaic_0001>
module attributes {stable_mosaic.version = 11 : i64} {
  func.func @_rbf_kernel(%arg0: i32, %arg1: memref<256x4xf32, #tpu.memory_space<vmem>>, %arg2: memref<1x128xf32, #tpu.memory_space<vmem>>, %arg3: memref<256x128xf32, #tpu.memory_space<vmem>>) attributes {dimension_semantics = [#tpu.dimension_semantics<parallel>], iteration_bounds = array<i64: 2>, scalar_prefetch = 0 : i64, scratch_operands = 0 : i64, tpu.core_type = #tpu.core_type<tc>, window_params = [{transform_indices = @transform_0, window_bounds = array<i64: 256, 4>}, {pipeline_mode = #tpu.pipeline_mode<synchronous>, transform_indices = @transform_1, window_bounds = array<i64: 1, 128>}, {transform_indices = @transform_2, window_bounds = array<i64: 256, 128>}]} {
    %c0 = arith.constant 0 : index
    %c0_0 = arith.constant 0 : index
    %0 = vector.load %arg1[%c0, %c0_0] : memref<256x4xf32, #tpu.memory_space<vmem>>, vector<256x4xf32>
    %1 = vector.extract_strided_slice %0 {offsets = [0, 0], sizes = [256, 2], strides = [1, 1]} : vector<256x4xf32> to vector<256x2xf32>
    %2 = vector.extract_strided_slice %0 {offsets = [0, 2], sizes = [256, 2], strides = [1, 1]} : vector<256x4xf32> to vector<256x2xf32>
    %c0_1 = arith.constant 0 : index
    %c0_2 = arith.constant 0 : index
    %3 = vector.load %arg2[%c0_1, %c0_2] : memref<1x128xf32, #tpu.memory_space<vmem>>, vector<1x128xf32>
    %4 = tpu.iota {dimensions = array<i32: 1>} : vector<256x128xi32>
    %5 = vector.extract_strided_slice %1 {offsets = [0, 0], sizes = [256, 1], strides = [1, 1]} : vector<256x2xf32> to vector<256x1xf32>
    %6 = vector.shape_cast %5 : vector<256x1xf32> to vector<256x1xf32>
    %7 = vector.broadcast %6 : vector<256x1xf32> to vector<256x128xf32>
    %8 = vector.extract_strided_slice %2 {offsets = [0, 0], sizes = [256, 1], strides = [1, 1]} : vector<256x2xf32> to vector<256x1xf32>
    %9 = vector.shape_cast %8 : vector<256x1xf32> to vector<256x1xf32>
    %10 = vector.broadcast %9 : vector<256x1xf32> to vector<256x128xf32>
    %c64_i32 = arith.constant 64 : i32
    %11 = vector.broadcast %c64_i32 : i32 to vector<256x128xi32>
    %12 = arith.cmpi sge, %4, %11 : vector<256x128xi32>
    %13 = vector.extract_strided_slice %1 {offsets = [0, 1], sizes = [256, 1], strides = [1, 1]} : vector<256x2xf32> to vector<256x1xf32>
    %14 = vector.shape_cast %13 : vector<256x1xf32> to vector<256x1xf32>
    %15 = vector.broadcast %14 : vector<256x1xf32> to vector<256x128xf32>
    %16 = arith.select %12, %15, %7 : vector<256x128xi1>, vector<256x128xf32>
    %17 = vector.extract_strided_slice %2 {offsets = [0, 1], sizes = [256, 1], strides = [1, 1]} : vector<256x2xf32> to vector<256x1xf32>
    %18 = vector.shape_cast %17 : vector<256x1xf32> to vector<256x1xf32>
    %19 = vector.broadcast %18 : vector<256x1xf32> to vector<256x128xf32>
    %20 = arith.select %12, %19, %10 : vector<256x128xi1>, vector<256x128xf32>
    %21 = vector.broadcast %3 : vector<1x128xf32> to vector<256x128xf32>
    %22 = arith.subf %20, %21 : vector<256x128xf32>
    %23 = arith.mulf %22, %22 : vector<256x128xf32>
    %24 = arith.subf %16, %23 : vector<256x128xf32>
    %25 = math.exp %24 : vector<256x128xf32>
    %c0_3 = arith.constant 0 : index
    %c0_4 = arith.constant 0 : index
    %26 = vector.load %arg3[%c0_3, %c0_4] : memref<256x128xf32, #tpu.memory_space<vmem>>, vector<256x128xf32>
    tpu.vector_store %arg3[%c0_3, %c0_4], %25 {strides = array<i32>} : memref<256x128xf32, #tpu.memory_space<vmem>>, vector<256x128xf32>,
    return
  }
  func.func @transform_0(%arg0: i32) -> (i32, i32) {
    %c0_i32 = arith.constant 0 : i32
    %c0_i32_0 = arith.constant 0 : i32
    return %arg0, %c0_i32 : i32, i32
  }
  func.func @transform_1(%arg0: i32) -> (i32, i32) {
    %c0_i32 = arith.constant 0 : i32
    %c0_i32_0 = arith.constant 0 : i32
    %c0_i32_1 = arith.constant 0 : i32
    return %c0_i32, %c0_i32_0 : i32, i32
  }
  func.func @transform_2(%arg0: i32) -> (i32, i32) {
    %c0_i32 = arith.constant 0 : i32
    %c0_i32_0 = arith.constant 0 : i32
    return %arg0, %c0_i32 : i32, i32
  }
}

</mosaic_0001>

<llo_original>
// kernel: tpu_custom_call.1
$region0: #{tpu_custom_call.1}
  #allocation0 [shape = 'u32[]', space=smem, size = 0x4, offset = 0x4, fixed_abs, tag = 'smem constant byte address 0x4 - core index']
  #allocation1 [shape = 'u32[72,128]{1,0:T(1,128)}', space=vmem, size = 0x9000, scoped, tag = 'internal scratch']
  %s0 = inlined_call_operand.vmem [shape: f32[500,4], index: 0, kind: input, shape index: {}]
  %s1 = inlined_call_operand.vmem [shape: f32[1,128], index: 1, kind: input, shape index: {}]
  %s2 = inlined_call_operand.hbm [shape: f32[500,128], index: 2, kind: output, shape index: {}]
  %s3 = sld [smem:[#allocation0]]
  $region41: #{tpu_custom_call.1} parent=0
    _
  %s5 = ssub.s32 1, %s3
  %s6 = scalar_select 0, %s5, %s3
  $region1: #{tpu_custom_call.1} parent=0
    #allocation2 [shape = 'u8[262144]{0}', space=vmem, size = 0x40000, scoped, tag = 'output window, operand 0']
    #allocation3 [shape = 's32[2]{0}', space=sflag, size = 0x8, scoped, tag = 'scoped memory for tpu_custom_call.1']
    %7 = vsyncpa [#allocation3], 0
    %s8 = scalar_lea.sflag [#allocation3], 1
    %9 = vsyncpa %s8, 0
    loop: start=0, step=1, limit=4
    $region2: #{tpu_custom_call.1} parent=1 // loop_pre_header
      _
    $region3: #{tpu_custom_call.1} parent=1 // loop_header
      %s11 = sphi 0, %s15
      %p12 = scmp.ge.s32.totalorder %s11, 4
      %s21 = sphi 0, %s23
      %s24 = sphi 0, %s21
      %s25 = sphi 0, %s24
      %s41 = sphi 0, %s25
      %s45 = sphi 0, %s45
      %s47 = sphi 0, %s45
      %s48 = sphi 0, %s47
      %s62 = sphi 0, %s48
      %s68 = sphi 0, %s70
      %s71 = sphi 0, %s68
      %s72 = sphi 0, %s71
      %s88 = sphi 0, %s72
    $region4: #{tpu_custom_call.1} parent=1 // loop_header_branch
      %14 = sbr.rel (%p12) target = $region8
    $region5: #{tpu_custom_call.1} parent=1 // loop_body
      %s16 = ssub.s32 %s11, 1
      %s17 = ssub.s32 %s11, 2
      %s18 = sadd.s32 %s11, 1
      %s19 = ssub.s32 %s11, %s18
      %p20 = scmp.eq.s32.totalorder %s19, 0
      %s22 = sadd.s32 %s21, 1
      %s23 = scalar_select %p20, %s21, %s22
      %p26 = pneg %p20
      %p27 = scmp.eq.s32.totalorder %s11, 1
      %p28 = por %p26, %p27
      %p29 = scmp.ne.s32.totalorder %s21, %s24
      %p30 = scmp.eq.s32.totalorder %s11, 0
      %p31 = por %p29, %p30
      %p32 = scmp.ne.s32.totalorder %s21, %s24
      %p33 = scmp.eq.s32.totalorder %s16, 1
      %p34 = por %p32, %p33
      %p35 = scmp.ne.s32.totalorder %s24, %s25
      %p36 = scmp.eq.s32.totalorder %s16, 0
      %p37 = por %p35, %p36
      %p38 = scmp.ne.s32.totalorder %s24, %s25
      %p39 = scmp.eq.s32.totalorder %s17, 1
      %p40 = por %p38, %p39
      %p42 = scmp.ne.s32.totalorder %s25, %s41
      %p43 = scmp.eq.s32.totalorder %s17, 0
      %p44 = por %p42, %p43
      %s46 = sadd.s32 %s45, 1
      %p49 = scmp.eq.s32.totalorder %s11, 1
      %p50 = scmp.ne.s32.totalorder %s45, %s47
      %p51 = scmp.eq.s32.totalorder %s11, 0
      %p52 = por %p50, %p51
      %p53 = scmp.ne.s32.totalorder %s45, %s47
      %p54 = scmp.eq.s32.totalorder %s16, 1
      %p55 = por %p53, %p54
      %p56 = scmp.ne.s32.totalorder %s47, %s48
      %p57 = scmp.eq.s32.totalorder %s16, 0
      %p58 = por %p56, %p57
      %p59 = scmp.ne.s32.totalorder %s47, %s48
      %p60 = scmp.eq.s32.totalorder %s17, 1
      %p61 = por %p59, %p60
      %p63 = scmp.ne.s32.totalorder %s48, %s62
      %p64 = scmp.eq.s32.totalorder %s17, 0
      %p65 = por %p63, %p64
      %s66 = ssub.s32 %s11, %s18
      %p67 = scmp.eq.s32.totalorder %s66, 0
      %s69 = sadd.s32 %s68, 1
      %s70 = scalar_select %p67, %s68, %s69
      %p73 = pneg %p67
      %p74 = scmp.eq.s32.totalorder %s11, 1
      %p75 = por %p73, %p74
      %p76 = scmp.ne.s32.totalorder %s68, %s71
      %p77 = scmp.eq.s32.totalorder %s11, 0
      %p78 = por %p76, %p77
      %p79 = scmp.ne.s32.totalorder %s68, %s71
      %p80 = scmp.eq.s32.totalorder %s16, 1
      %p81 = por %p79, %p80
      %p82 = scmp.ne.s32.totalorder %s71, %s72
      %p83 = scmp.eq.s32.totalorder %s16, 0
      %p84 = por %p82, %p83
      %p85 = scmp.ne.s32.totalorder %s71, %s72
      %p86 = scmp.eq.s32.totalorder %s17, 1
      %p87 = por %p85, %p86
      %p89 = scmp.ne.s32.totalorder %s72, %s88
      %p90 = scmp.eq.s32.totalorder %s17, 0
      %p91 = por %p89, %p90
      %p92 = scmp.le.s32.totalorder 1, %s11
      %p93 = scmp.lt.s32.totalorder %s11, 3
      %p94 = pnand %p92, %p93
      %p95 = pneg %p94
      // Predicated region
      $region9: #{tpu_custom_call.1} parent=5 // pred_check
        _
      $region10: #{tpu_custom_call.1} parent=5 // pred_check_branch
        %97 = sbr.rel (%p94) target = $region12
      $region11: #{tpu_custom_call.1} parent=5 // pred_region
        %s98 = ssub.s32 %s11, 1
        // Predicated region
        $region13: #{tpu_custom_call.1} parent=11 // pred_check
          %p99 = pneg %p58
        $region14: #{tpu_custom_call.1} parent=11 // pred_check_branch
          %101 = sbr.rel (%p99) target = $region16
        $region15: #{tpu_custom_call.1} parent=11 // pred_region
          _
        $region16: #{tpu_custom_call.1} parent=11 // pred_fallthru
          _
      $region12: #{tpu_custom_call.1} parent=5 // pred_fallthru
        _
      %p102 = scmp.lt.s32.totalorder %s11, 2
      // Predicated region
      $region17: #{tpu_custom_call.1} parent=5 // pred_check
        %p103 = pneg %p102
      $region18: #{tpu_custom_call.1} parent=5 // pred_check_branch
        %105 = sbr.rel (%p103) target = $region20
      $region19: #{tpu_custom_call.1} parent=5 // pred_region
        // Predicated region
        $region21: #{tpu_custom_call.1} parent=19 // pred_check
          %p106 = pneg %p31
        $region22: #{tpu_custom_call.1} parent=19 // pred_check_branch
          %108 = sbr.rel (%p106) target = $region24
        $region23: #{tpu_custom_call.1} parent=19 // pred_region
          %s109 = smul.u32 32, %s11
          %s110 = ssub.s32 63, %s109
          %p111 = scmp.lt.s32.totalorder %s110, 32
          %s112 = scalar_select %p111, %s110, 32
          %s113 = smul.u32 8, %s112
          %p114 = scmp.lt.s32.totalorder %s109, 62
          %s115 = scalar_select %p114, %s109, 62
          %s116 = smul.addr %s115, 8
          %s117 = scalar_lea.vmem %s0, %s116
          %s118 = smul.u32 32, %s11
          %s119 = ssub.s32 63, %s118
          %p120 = scmp.lt.s32.totalorder %s119, 32
          %s121 = scalar_select %p120, %s119, 32
          %s122 = smul.u32 8, %s121
        $region24: #{tpu_custom_call.1} parent=19 // pred_fallthru
          _
      $region20: #{tpu_custom_call.1} parent=5 // pred_fallthru
        _
      %p123 = scmp.le.s32.totalorder 1, %s11
      %p124 = scmp.lt.s32.totalorder %s11, 3
      %p125 = pnand %p123, %p124
      %p126 = pneg %p125
      // Predicated region
      $region25: #{tpu_custom_call.1} parent=5 // pred_check
        _
      $region26: #{tpu_custom_call.1} parent=5 // pred_check_branch
        %128 = sbr.rel (%p125) target = $region28
      $region27: #{tpu_custom_call.1} parent=5 // pred_region
        %s129 = ssub.s32 %s11, 1
        %s130 = smul.u32 32, %s16
        %s131 = ssub.s32 63, %s130
        %p132 = scmp.lt.s32.totalorder %s131, 32
        %s133 = scalar_select %p132, %s131, 32
        %s134 = smul.u32 8, %s133
        %p135 = scmp.lt.s32.totalorder %s130, 62
        %s136 = scalar_select %p135, %s130, 62
        %s137 = smul.addr %s136, 8
        %s138 = scalar_lea.vmem %s0, %s137
        %p139 = pneg %p37
        %p140 = pneg %p34
        %p141 = pneg %p58
        %p142 = pneg %p55
        %p143 = pneg %p84
        %p144 = pneg %p81
        %s145 = sand.u32 %s71, 1
        %s146 = scalar_lea.sflag [#allocation3], %s145
        %s147 = sand.u32 %s71, 1
        %s148 = smul.addr %s147, 256
        %s149 = scalar_lea.vmem [#allocation2], %s148
        %s150 = smul.u32 32, %s16
        %s151 = ssub.s32 63, %s150
        %p152 = scmp.lt.s32.totalorder %s151, 32
        %s153 = scalar_select %p152, %s151, 32
        %s154 = smul.u32 8, %s153
        %p155 = scmp.lt.s32.totalorder %s150, 62
        %s156 = scalar_select %p155, %s150, 62
        %s157 = smul.addr %s156, 8
        %s158 = scalar_lea.vmem %s0, %s157
        %s159 = smul.u32 32, %s16
        %s160 = ssub.s32 63, %s159
        %p161 = scmp.lt.s32.totalorder %s160, 32
        %s162 = scalar_select %p161, %s160, 32
        %s163 = smul.u32 8, %s162
        %s164 = smul.u32 32, %s16
        %s165 = ssub.s32 63, %s164
        %p166 = scmp.lt.s32.totalorder %s165, 32
        %s167 = scalar_select %p166, %s165, 32
        %s168 = smul.u32 8, %s167
        %v169 = vld [vmem:[%s158] sm:$0xff]
        %v170 = vld [vmem:[%s158 + $0x8] sm:$0xff]
        %v171 = vld [vmem:[%s158 + $0x10] sm:$0xff]
        %v172 = vld [vmem:[%s158 + $0x18] sm:$0xff]
        %v173 = vld [vmem:[%s158 + $0x20] sm:$0xff]
        %v174 = vld [vmem:[%s158 + $0x28] sm:$0xff]
        %v175 = vld [vmem:[%s158 + $0x30] sm:$0xff]
        %v176 = vld [vmem:[%s158 + $0x38] sm:$0xff]
        %v177 = vld [vmem:[%s158 + $0x40] sm:$0xff]
        %v178 = vld [vmem:[%s158 + $0x48] sm:$0xff]
        %v179 = vld [vmem:[%s158 + $0x50] sm:$0xff]
        %v180 = vld [vmem:[%s158 + $0x58] sm:$0xff]
        %v181 = vld [vmem:[%s158 + $0x60] sm:$0xff]
        %v182 = vld [vmem:[%s158 + $0x68] sm:$0xff]
        %v183 = vld [vmem:[%s158 + $0x70] sm:$0xff]
        %v184 = vld [vmem:[%s158 + $0x78] sm:$0xff]
        %v185 = vld [vmem:[%s158 + $0x80] sm:$0xff]
        %v186 = vld [vmem:[%s158 + $0x88] sm:$0xff]
        %v187 = vld [vmem:[%s158 + $0x90] sm:$0xff]
        %v188 = vld [vmem:[%s158 + $0x98] sm:$0xff]
        %v189 = vld [vmem:[%s158 + $0xa0] sm:$0xff]
        %v190 = vld [vmem:[%s158 + $0xa8] sm:$0xff]
        %v191 = vld [vmem:[%s158 + $0xb0] sm:$0xff]
        %v192 = vld [vmem:[%s158 + $0xb8] sm:$0xff]
        %v193 = vld [vmem:[%s158 + $0xc0] sm:$0xff]
        %v194 = vld [vmem:[%s158 + $0xc8] sm:$0xff]
        %v195 = vld [vmem:[%s158 + $0xd0] sm:$0xff]
        %v196 = vld [vmem:[%s158 + $0xd8] sm:$0xff]
        %v197 = vld [vmem:[%s158 + $0xe0] sm:$0xff]
        %v198 = vld [vmem:[%s158 + $0xe8] sm:$0xff]
        %v199 = vld [vmem:[%s158 + $0xf0] sm:$0xff]
        %v200 = vld [vmem:[%s158 + $0xf8] sm:$0xff]
        %v201 = vld [vmem:[%s1] sm:$0x1]
        %v202 = vlaneseq
        %v203 = vand.u32 %v202, 127
        %205 = vset.pattern.permute.xlu0 0
        %206 = vperm.xlu0 %205, %v169
        %v207 = vpop.permute.xlu0 %206
        %210 = vset.pattern.permute.xlu0 0
        %211 = vperm.xlu0 %210, %v170
        %v212 = vpop.permute.xlu0 %211
        %215 = vset.pattern.permute.xlu0 0
        %216 = vperm.xlu0 %215, %v171
        %v217 = vpop.permute.xlu0 %216
        %220 = vset.pattern.permute.xlu0 0
        %221 = vperm.xlu0 %220, %v172
        %v222 = vpop.permute.xlu0 %221
        %225 = vset.pattern.permute.xlu0 0
        %226 = vperm.xlu0 %225, %v173
        %v227 = vpop.permute.xlu0 %226
        %230 = vset.pattern.permute.xlu0 0
        %231 = vperm.xlu0 %230, %v174
        %v232 = vpop.permute.xlu0 %231
        %235 = vset.pattern.permute.xlu0 0
        %236 = vperm.xlu0 %235, %v175
        %v237 = vpop.permute.xlu0 %236
        %240 = vset.pattern.permute.xlu0 0
        %241 = vperm.xlu0 %240, %v176
        %v242 = vpop.permute.xlu0 %241
        %245 = vset.pattern.permute.xlu0 0
        %246 = vperm.xlu0 %245, %v177
        %v247 = vpop.permute.xlu0 %246
        %250 = vset.pattern.permute.xlu0 0
        %251 = vperm.xlu0 %250, %v178
        %v252 = vpop.permute.xlu0 %251
        %255 = vset.pattern.permute.xlu0 0
        %256 = vperm.xlu0 %255, %v179
        %v257 = vpop.permute.xlu0 %256
        %260 = vset.pattern.permute.xlu0 0
        %261 = vperm.xlu0 %260, %v180
        %v262 = vpop.permute.xlu0 %261
        %265 = vset.pattern.permute.xlu0 0
        %266 = vperm.xlu0 %265, %v181
        %v267 = vpop.permute.xlu0 %266
        %270 = vset.pattern.permute.xlu0 0
        %271 = vperm.xlu0 %270, %v182
        %v272 = vpop.permute.xlu0 %271
        %275 = vset.pattern.permute.xlu0 0
        %276 = vperm.xlu0 %275, %v183
        %v277 = vpop.permute.xlu0 %276
        %280 = vset.pattern.permute.xlu0 0
        %281 = vperm.xlu0 %280, %v184
        %v282 = vpop.permute.xlu0 %281
        %285 = vset.pattern.permute.xlu0 0
        %286 = vperm.xlu0 %285, %v185
        %v287 = vpop.permute.xlu0 %286
        %290 = vset.pattern.permute.xlu0 0
        %291 = vperm.xlu0 %290, %v186
        %v292 = vpop.permute.xlu0 %291
        %295 = vset.pattern.permute.xlu0 0
        %296 = vperm.xlu0 %295, %v187
        %v297 = vpop.permute.xlu0 %296
        %300 = vset.pattern.permute.xlu0 0
        %301 = vperm.xlu0 %300, %v188
        %v302 = vpop.permute.xlu0 %301
        %305 = vset.pattern.permute.xlu0 0
        %306 = vperm.xlu0 %305, %v189
        %v307 = vpop.permute.xlu0 %306
        %310 = vset.pattern.permute.xlu0 0
        %311 = vperm.xlu0 %310, %v190
        %v312 = vpop.permute.xlu0 %311
        %315 = vset.pattern.permute.xlu0 0
        %316 = vperm.xlu0 %315, %v191
        %v317 = vpop.permute.xlu0 %316
        %320 = vset.pattern.permute.xlu0 0
        %321 = vperm.xlu0 %320, %v192
        %v322 = vpop.permute.xlu0 %321
        %325 = vset.pattern.permute.xlu0 0
        %326 = vperm.xlu0 %325, %v193
        %v327 = vpop.permute.xlu0 %326
        %330 = vset.pattern.permute.xlu0 0
        %331 = vperm.xlu0 %330, %v194
        %v332 = vpop.permute.xlu0 %331
        %335 = vset.pattern.permute.xlu0 0
        %336 = vperm.xlu0 %335, %v195
        %v337 = vpop.permute.xlu0 %336
        %340 = vset.pattern.permute.xlu0 0
        %341 = vperm.xlu0 %340, %v196
        %v342 = vpop.permute.xlu0 %341
        %345 = vset.pattern.permute.xlu0 0
        %346 = vperm.xlu0 %345, %v197
        %v347 = vpop.permute.xlu0 %346
        %350 = vset.pattern.permute.xlu0 0
        %351 = vperm.xlu0 %350, %v198
        %v352 = vpop.permute.xlu0 %351
        %355 = vset.pattern.permute.xlu0 0
        %356 = vperm.xlu0 %355, %v199
        %v357 = vpop.permute.xlu0 %356
        %360 = vset.pattern.permute.xlu0 0
        %361 = vperm.xlu0 %360, %v200
        %v362 = vpop.permute.xlu0 %361
        %364 = vset.pattern.permute.xlu0 2
        %365 = vperm.xlu0 %364, %v169
        %v366 = vpop.permute.xlu0 %365
        %368 = vset.pattern.permute.xlu0 2
        %369 = vperm.xlu0 %368, %v170
        %v370 = vpop.permute.xlu0 %369
        %372 = vset.pattern.permute.xlu0 2
        %373 = vperm.xlu0 %372, %v171
        %v374 = vpop.permute.xlu0 %373
        %376 = vset.pattern.permute.xlu0 2
        %377 = vperm.xlu0 %376, %v172
        %v378 = vpop.permute.xlu0 %377
        %380 = vset.pattern.permute.xlu0 2
        %381 = vperm.xlu0 %380, %v173
        %v382 = vpop.permute.xlu0 %381
        %384 = vset.pattern.permute.xlu0 2
        %385 = vperm.xlu0 %384, %v174
        %v386 = vpop.permute.xlu0 %385
        %388 = vset.pattern.permute.xlu0 2
        %389 = vperm.xlu0 %388, %v175
        %v390 = vpop.permute.xlu0 %389
        %392 = vset.pattern.permute.xlu0 2
        %393 = vperm.xlu0 %392, %v176
        %v394 = vpop.permute.xlu0 %393
        %396 = vset.pattern.permute.xlu0 2
        %397 = vperm.xlu0 %396, %v177
        %v398 = vpop.permute.xlu0 %397
        %400 = vset.pattern.permute.xlu0 2
        %401 = vperm.xlu0 %400, %v178
        %v402 = vpop.permute.xlu0 %401
        %404 = vset.pattern.permute.xlu0 2
        %405 = vperm.xlu0 %404, %v179
        %v406 = vpop.permute.xlu0 %405
        %408 = vset.pattern.permute.xlu0 2
        %409 = vperm.xlu0 %408, %v180
        %v410 = vpop.permute.xlu0 %409
        %412 = vset.pattern.permute.xlu0 2
        %413 = vperm.xlu0 %412, %v181
        %v414 = vpop.permute.xlu0 %413
        %416 = vset.pattern.permute.xlu0 2
        %417 = vperm.xlu0 %416, %v182
        %v418 = vpop.permute.xlu0 %417
        %420 = vset.pattern.permute.xlu0 2
        %421 = vperm.xlu0 %420, %v183
        %v422 = vpop.permute.xlu0 %421
        %424 = vset.pattern.permute.xlu0 2
        %425 = vperm.xlu0 %424, %v184
        %v426 = vpop.permute.xlu0 %425
        %428 = vset.pattern.permute.xlu0 2
        %429 = vperm.xlu0 %428, %v185
        %v430 = vpop.permute.xlu0 %429
        %432 = vset.pattern.permute.xlu0 2
        %433 = vperm.xlu0 %432, %v186
        %v434 = vpop.permute.xlu0 %433
        %436 = vset.pattern.permute.xlu0 2
        %437 = vperm.xlu0 %436, %v187
        %v438 = vpop.permute.xlu0 %437
        %440 = vset.pattern.permute.xlu0 2
        %441 = vperm.xlu0 %440, %v188
        %v442 = vpop.permute.xlu0 %441
        %444 = vset.pattern.permute.xlu0 2
        %445 = vperm.xlu0 %444, %v189
        %v446 = vpop.permute.xlu0 %445
        %448 = vset.pattern.permute.xlu0 2
        %449 = vperm.xlu0 %448, %v190
        %v450 = vpop.permute.xlu0 %449
        %452 = vset.pattern.permute.xlu0 2
        %453 = vperm.xlu0 %452, %v191
        %v454 = vpop.permute.xlu0 %453
        %456 = vset.pattern.permute.xlu0 2
        %457 = vperm.xlu0 %456, %v192
        %v458 = vpop.permute.xlu0 %457
        %460 = vset.pattern.permute.xlu0 2
        %461 = vperm.xlu0 %460, %v193
        %v462 = vpop.permute.xlu0 %461
        %464 = vset.pattern.permute.xlu0 2
        %465 = vperm.xlu0 %464, %v194
        %v466 = vpop.permute.xlu0 %465
        %468 = vset.pattern.permute.xlu0 2
        %469 = vperm.xlu0 %468, %v195
        %v470 = vpop.permute.xlu0 %469
        %472 = vset.pattern.permute.xlu0 2
        %473 = vperm.xlu0 %472, %v196
        %v474 = vpop.permute.xlu0 %473
        %476 = vset.pattern.permute.xlu0 2
        %477 = vperm.xlu0 %476, %v197
        %v478 = vpop.permute.xlu0 %477
        %480 = vset.pattern.permute.xlu0 2
        %481 = vperm.xlu0 %480, %v198
        %v482 = vpop.permute.xlu0 %481
        %484 = vset.pattern.permute.xlu0 2
        %485 = vperm.xlu0 %484, %v199
        %v486 = vpop.permute.xlu0 %485
        %488 = vset.pattern.permute.xlu0 2
        %489 = vperm.xlu0 %488, %v200
        %v490 = vpop.permute.xlu0 %489
        %vm492 = vcmp.ge.s32.totalorder %v203, 64
        %493 = vset.pattern.permute.xlu0 1
        %494 = vperm.xlu0 %493, %v169
        %v495 = vpop.permute.xlu0 %494
        %497 = vset.pattern.permute.xlu0 1
        %498 = vperm.xlu0 %497, %v170
        %v499 = vpop.permute.xlu0 %498
        %501 = vset.pattern.permute.xlu0 1
        %502 = vperm.xlu0 %501, %v171
        %v503 = vpop.permute.xlu0 %502
        %505 = vset.pattern.permute.xlu0 1
        %506 = vperm.xlu0 %505, %v172
        %v507 = vpop.permute.xlu0 %506
        %509 = vset.pattern.permute.xlu0 1
        %510 = vperm.xlu0 %509, %v173
        %v511 = vpop.permute.xlu0 %510
        %513 = vset.pattern.permute.xlu0 1
        %514 = vperm.xlu0 %513, %v174
        %v515 = vpop.permute.xlu0 %514
        %517 = vset.pattern.permute.xlu0 1
        %518 = vperm.xlu0 %517, %v175
        %v519 = vpop.permute.xlu0 %518
        %521 = vset.pattern.permute.xlu0 1
        %522 = vperm.xlu0 %521, %v176
        %v523 = vpop.permute.xlu0 %522
        %525 = vset.pattern.permute.xlu0 1
        %526 = vperm.xlu0 %525, %v177
        %v527 = vpop.permute.xlu0 %526
        %529 = vset.pattern.permute.xlu0 1
        %530 = vperm.xlu0 %529, %v178
        %v531 = vpop.permute.xlu0 %530
        %533 = vset.pattern.permute.xlu0 1
        %534 = vperm.xlu0 %533, %v179
        %v535 = vpop.permute.xlu0 %534
        %537 = vset.pattern.permute.xlu0 1
        %538 = vperm.xlu0 %537, %v180
        %v539 = vpop.permute.xlu0 %538
        %541 = vset.pattern.permute.xlu0 1
        %542 = vperm.xlu0 %541, %v181
        %v543 = vpop.permute.xlu0 %542
        %545 = vset.pattern.permute.xlu0 1
        %546 = vperm.xlu0 %545, %v182
        %v547 = vpop.permute.xlu0 %546
        %549 = vset.pattern.permute.xlu0 1
        %550 = vperm.xlu0 %549, %v183
        %v551 = vpop.permute.xlu0 %550
        %553 = vset.pattern.permute.xlu0 1
        %554 = vperm.xlu0 %553, %v184
        %v555 = vpop.permute.xlu0 %554
        %557 = vset.pattern.permute.xlu0 1
        %558 = vperm.xlu0 %557, %v185
        %v559 = vpop.permute.xlu0 %558
        %561 = vset.pattern.permute.xlu0 1
        %562 = vperm.xlu0 %561, %v186
        %v563 = vpop.permute.xlu0 %562
        %565 = vset.pattern.permute.xlu0 1
        %566 = vperm.xlu0 %565, %v187
        %v567 = vpop.permute.xlu0 %566
        %569 = vset.pattern.permute.xlu0 1
        %570 = vperm.xlu0 %569, %v188
        %v571 = vpop.permute.xlu0 %570
        %573 = vset.pattern.permute.xlu0 1
        %574 = vperm.xlu0 %573, %v189
        %v575 = vpop.permute.xlu0 %574
        %577 = vset.pattern.permute.xlu0 1
        %578 = vperm.xlu0 %577, %v190
        %v579 = vpop.permute.xlu0 %578
        %581 = vset.pattern.permute.xlu0 1
        %582 = vperm.xlu0 %581, %v191
        %v583 = vpop.permute.xlu0 %582
        %585 = vset.pattern.permute.xlu0 1
        %586 = vperm.xlu0 %585, %v192
        %v587 = vpop.permute.xlu0 %586
        %589 = vset.pattern.permute.xlu0 1
        %590 = vperm.xlu0 %589, %v193
        %v591 = vpop.permute.xlu0 %590
        %593 = vset.pattern.permute.xlu0 1
        %594 = vperm.xlu0 %593, %v194
        %v595 = vpop.permute.xlu0 %594
        %597 = vset.pattern.permute.xlu0 1
        %598 = vperm.xlu0 %597, %v195
        %v599 = vpop.permute.xlu0 %598
        %601 = vset.pattern.permute.xlu0 1
        %602 = vperm.xlu0 %601, %v196
        %v603 = vpop.permute.xlu0 %602
        %605 = vset.pattern.permute.xlu0 1
        %606 = vperm.xlu0 %605, %v197
        %v607 = vpop.permute.xlu0 %606
        %609 = vset.pattern.permute.xlu0 1
        %610 = vperm.xlu0 %609, %v198
        %v611 = vpop.permute.xlu0 %610
        %613 = vset.pattern.permute.xlu0 1
        %614 = vperm.xlu0 %613, %v199
        %v615 = vpop.permute.xlu0 %614
        %617 = vset.pattern.permute.xlu0 1
        %618 = vperm.xlu0 %617, %v200
        %v619 = vpop.permute.xlu0 %618
        %v621 = vsel %vm492, %v495, %v207
        %v622 = vsel %vm492, %v499, %v212
        %v623 = vsel %vm492, %v503, %v217
        %v624 = vsel %vm492, %v507, %v222
        %v625 = vsel %vm492, %v511, %v227
        %v626 = vsel %vm492, %v515, %v232
        %v627 = vsel %vm492, %v519, %v237
        %v628 = vsel %vm492, %v523, %v242
        %v629 = vsel %vm492, %v527, %v247
        %v630 = vsel %vm492, %v531, %v252
        %v631 = vsel %vm492, %v535, %v257
        %v632 = vsel %vm492, %v539, %v262
        %v633 = vsel %vm492, %v543, %v267
        %v634 = vsel %vm492, %v547, %v272
        %v635 = vsel %vm492, %v551, %v277
        %v636 = vsel %vm492, %v555, %v282
        %v637 = vsel %vm492, %v559, %v287
        %v638 = vsel %vm492, %v563, %v292
        %v639 = vsel %vm492, %v567, %v297
        %v640 = vsel %vm492, %v571, %v302
        %v641 = vsel %vm492, %v575, %v307
        %v642 = vsel %vm492, %v579, %v312
        %v643 = vsel %vm492, %v583, %v317
        %v644 = vsel %vm492, %v587, %v322
        %v645 = vsel %vm492, %v591, %v327
        %v646 = vsel %vm492, %v595, %v332
        %v647 = vsel %vm492, %v599, %v337
        %v648 = vsel %vm492, %v603, %v342
        %v649 = vsel %vm492, %v607, %v347
        %v650 = vsel %vm492, %v611, %v352
        %v651 = vsel %vm492, %v615, %v357
        %v652 = vsel %vm492, %v619, %v362
        %653 = vset.pattern.permute.xlu0 3
        %654 = vperm.xlu0 %653, %v169
        %v655 = vpop.permute.xlu0 %654
        %657 = vset.pattern.permute.xlu0 3
        %658 = vperm.xlu0 %657, %v170
        %v659 = vpop.permute.xlu0 %658
        %661 = vset.pattern.permute.xlu0 3
        %662 = vperm.xlu0 %661, %v171
        %v663 = vpop.permute.xlu0 %662
        %665 = vset.pattern.permute.xlu0 3
        %666 = vperm.xlu0 %665, %v172
        %v667 = vpop.permute.xlu0 %666
        %669 = vset.pattern.permute.xlu0 3
        %670 = vperm.xlu0 %669, %v173
        %v671 = vpop.permute.xlu0 %670
        %673 = vset.pattern.permute.xlu0 3
        %674 = vperm.xlu0 %673, %v174
        %v675 = vpop.permute.xlu0 %674
        %677 = vset.pattern.permute.xlu0 3
        %678 = vperm.xlu0 %677, %v175
        %v679 = vpop.permute.xlu0 %678
        %681 = vset.pattern.permute.xlu0 3
        %682 = vperm.xlu0 %681, %v176
        %v683 = vpop.permute.xlu0 %682
        %685 = vset.pattern.permute.xlu0 3
        %686 = vperm.xlu0 %685, %v177
        %v687 = vpop.permute.xlu0 %686
        %689 = vset.pattern.permute.xlu0 3
        %690 = vperm.xlu0 %689, %v178
        %v691 = vpop.permute.xlu0 %690
        %693 = vset.pattern.permute.xlu0 3
        %694 = vperm.xlu0 %693, %v179
        %v695 = vpop.permute.xlu0 %694
        %697 = vset.pattern.permute.xlu0 3
        %698 = vperm.xlu0 %697, %v180
        %v699 = vpop.permute.xlu0 %698
        %701 = vset.pattern.permute.xlu0 3
        %702 = vperm.xlu0 %701, %v181
        %v703 = vpop.permute.xlu0 %702
        %705 = vset.pattern.permute.xlu0 3
        %706 = vperm.xlu0 %705, %v182
        %v707 = vpop.permute.xlu0 %706
        %709 = vset.pattern.permute.xlu0 3
        %710 = vperm.xlu0 %709, %v183
        %v711 = vpop.permute.xlu0 %710
        %713 = vset.pattern.permute.xlu0 3
        %714 = vperm.xlu0 %713, %v184
        %v715 = vpop.permute.xlu0 %714
        %717 = vset.pattern.permute.xlu0 3
        %718 = vperm.xlu0 %717, %v185
        %v719 = vpop.permute.xlu0 %718
        %721 = vset.pattern.permute.xlu0 3
        %722 = vperm.xlu0 %721, %v186
        %v723 = vpop.permute.xlu0 %722
        %725 = vset.pattern.permute.xlu0 3
        %726 = vperm.xlu0 %725, %v187
        %v727 = vpop.permute.xlu0 %726
        %729 = vset.pattern.permute.xlu0 3
        %730 = vperm.xlu0 %729, %v188
        %v731 = vpop.permute.xlu0 %730
        %733 = vset.pattern.permute.xlu0 3
        %734 = vperm.xlu0 %733, %v189
        %v735 = vpop.permute.xlu0 %734
        %737 = vset.pattern.permute.xlu0 3
        %738 = vperm.xlu0 %737, %v190
        %v739 = vpop.permute.xlu0 %738
        %741 = vset.pattern.permute.xlu0 3
        %742 = vperm.xlu0 %741, %v191
        %v743 = vpop.permute.xlu0 %742
        %745 = vset.pattern.permute.xlu0 3
        %746 = vperm.xlu0 %745, %v192
        %v747 = vpop.permute.xlu0 %746
        %749 = vset.pattern.permute.xlu0 3
        %750 = vperm.xlu0 %749, %v193
        %v751 = vpop.permute.xlu0 %750
        %753 = vset.pattern.permute.xlu0 3
        %754 = vperm.xlu0 %753, %v194
        %v755 = vpop.permute.xlu0 %754
        %757 = vset.pattern.permute.xlu0 3
        %758 = vperm.xlu0 %757, %v195
        %v759 = vpop.permute.xlu0 %758
        %761 = vset.pattern.permute.xlu0 3
        %762 = vperm.xlu0 %761, %v196
        %v763 = vpop.permute.xlu0 %762
        %765 = vset.pattern.permute.xlu0 3
        %766 = vperm.xlu0 %765, %v197
        %v767 = vpop.permute.xlu0 %766
        %769 = vset.pattern.permute.xlu0 3
        %770 = vperm.xlu0 %769, %v198
        %v771 = vpop.permute.xlu0 %770
        %773 = vset.pattern.permute.xlu0 3
        %774 = vperm.xlu0 %773, %v199
        %v775 = vpop.permute.xlu0 %774
        %777 = vset.pattern.permute.xlu0 3
        %778 = vperm.xlu0 %777, %v200
        %v779 = vpop.permute.xlu0 %778
        %v781 = vsel %vm492, %v655, %v366
        %v782 = vsel %vm492, %v659, %v370
        %v783 = vsel %vm492, %v663, %v374
        %v784 = vsel %vm492, %v667, %v378
        %v785 = vsel %vm492, %v671, %v382
        %v786 = vsel %vm492, %v675, %v386
        %v787 = vsel %vm492, %v679, %v390
        %v788 = vsel %vm492, %v683, %v394
        %v789 = vsel %vm492, %v687, %v398
        %v790 = vsel %vm492, %v691, %v402
        %v791 = vsel %vm492, %v695, %v406
        %v792 = vsel %vm492, %v699, %v410
        %v793 = vsel %vm492, %v703, %v414
        %v794 = vsel %vm492, %v707, %v418
        %v795 = vsel %vm492, %v711, %v422
        %v796 = vsel %vm492, %v715, %v426
        %v797 = vsel %vm492, %v719, %v430
        %v798 = vsel %vm492, %v723, %v434
        %v799 = vsel %vm492, %v727, %v438
        %v800 = vsel %vm492, %v731, %v442
        %v801 = vsel %vm492, %v735, %v446
        %v802 = vsel %vm492, %v739, %v450
        %v803 = vsel %vm492, %v743, %v454
        %v804 = vsel %vm492, %v747, %v458
        %v805 = vsel %vm492, %v751, %v462
        %v806 = vsel %vm492, %v755, %v466
        %v807 = vsel %vm492, %v759, %v470
        %v808 = vsel %vm492, %v763, %v474
        %v809 = vsel %vm492, %v767, %v478
        %v810 = vsel %vm492, %v771, %v482
        %v811 = vsel %vm492, %v775, %v486
        %v812 = vsel %vm492, %v779, %v490
        %v814 = vperm.slane %v201, 0
        %v816 = vsub.f32 %v781, %v814
        %v817 = vsub.f32 %v782, %v814
        %v818 = vsub.f32 %v783, %v814
        %v819 = vsub.f32 %v784, %v814
        %v820 = vsub.f32 %v785, %v814
        %v821 = vsub.f32 %v786, %v814
        %v822 = vsub.f32 %v787, %v814
        %v823 = vsub.f32 %v788, %v814
        %v824 = vsub.f32 %v789, %v814
        %v825 = vsub.f32 %v790, %v814
        %v826 = vsub.f32 %v791, %v814
        %v827 = vsub.f32 %v792, %v814
        %v828 = vsub.f32 %v793, %v814
        %v829 = vsub.f32 %v794, %v814
        %v830 = vsub.f32 %v795, %v814
        %v831 = vsub.f32 %v796, %v814
        %v832 = vsub.f32 %v797, %v814
        %v833 = vsub.f32 %v798, %v814
        %v834 = vsub.f32 %v799, %v814
        %v835 = vsub.f32 %v800, %v814
        %v836 = vsub.f32 %v801, %v814
        %v837 = vsub.f32 %v802, %v814
        %v838 = vsub.f32 %v803, %v814
        %v839 = vsub.f32 %v804, %v814
        %v840 = vsub.f32 %v805, %v814
        %v841 = vsub.f32 %v806, %v814
        %v842 = vsub.f32 %v807, %v814
        %v843 = vsub.f32 %v808, %v814
        %v844 = vsub.f32 %v809, %v814
        %v845 = vsub.f32 %v810, %v814
        %v846 = vsub.f32 %v811, %v814
        %v847 = vsub.f32 %v812, %v814
        %v848 = vmul.f32 %v816, %v816
        %v849 = vmul.f32 %v817, %v817
        %v850 = vmul.f32 %v818, %v818
        %v851 = vmul.f32 %v819, %v819
        %v852 = vmul.f32 %v820, %v820
        %v853 = vmul.f32 %v821, %v821
        %v854 = vmul.f32 %v822, %v822
        %v855 = vmul.f32 %v823, %v823
        %v856 = vmul.f32 %v824, %v824
        %v857 = vmul.f32 %v825, %v825
        %v858 = vmul.f32 %v826, %v826
        %v859 = vmul.f32 %v827, %v827
        %v860 = vmul.f32 %v828, %v828
        %v861 = vmul.f32 %v829, %v829
        %v862 = vmul.f32 %v830, %v830
        %v863 = vmul.f32 %v831, %v831
        %v864 = vmul.f32 %v832, %v832
        %v865 = vmul.f32 %v833, %v833
        %v866 = vmul.f32 %v834, %v834
        %v867 = vmul.f32 %v835, %v835
        %v868 = vmul.f32 %v836, %v836
        %v869 = vmul.f32 %v837, %v837
        %v870 = vmul.f32 %v838, %v838
        %v871 = vmul.f32 %v839, %v839
        %v872 = vmul.f32 %v840, %v840
        %v873 = vmul.f32 %v841, %v841
        %v874 = vmul.f32 %v842, %v842
        %v875 = vmul.f32 %v843, %v843
        %v876 = vmul.f32 %v844, %v844
        %v877 = vmul.f32 %v845, %v845
        %v878 = vmul.f32 %v846, %v846
        %v879 = vmul.f32 %v847, %v847
        %v880 = vsub.f32 %v621, %v848
        %v881 = vsub.f32 %v622, %v849
        %v882 = vsub.f32 %v623, %v850
        %v883 = vsub.f32 %v624, %v851
        %v884 = vsub.f32 %v625, %v852
        %v885 = vsub.f32 %v626, %v853
        %v886 = vsub.f32 %v627, %v854
        %v887 = vsub.f32 %v628, %v855
        %v888 = vsub.f32 %v629, %v856
        %v889 = vsub.f32 %v630, %v857
        %v890 = vsub.f32 %v631, %v858
        %v891 = vsub.f32 %v632, %v859
        %v892 = vsub.f32 %v633, %v860
        %v893 = vsub.f32 %v634, %v861
        %v894 = vsub.f32 %v635, %v862
        %v895 = vsub.f32 %v636, %v863
        %v896 = vsub.f32 %v637, %v864
        %v897 = vsub.f32 %v638, %v865
        %v898 = vsub.f32 %v639, %v866
        %v899 = vsub.f32 %v640, %v867
        %v900 = vsub.f32 %v641, %v868
        %v901 = vsub.f32 %v642, %v869
        %v902 = vsub.f32 %v643, %v870
        %v903 = vsub.f32 %v644, %v871
        %v904 = vsub.f32 %v645, %v872
        %v905 = vsub.f32 %v646, %v873
        %v906 = vsub.f32 %v647, %v874
        %v907 = vsub.f32 %v648, %v875
        %v908 = vsub.f32 %v649, %v876
        %v909 = vsub.f32 %v650, %v877
        %v910 = vsub.f32 %v651, %v878
        %v911 = vsub.f32 %v652, %v879
        %v912 = vmul.f32 %v880, 1.442695
        %v913 = vpow.pop %v912
        %v914 = vmul.f32 %v881, 1.442695
        %v915 = vpow.pop %v914
        %v916 = vmul.f32 %v882, 1.442695
        %v917 = vpow.pop %v916
        %v918 = vmul.f32 %v883, 1.442695
        %v919 = vpow.pop %v918
        %v920 = vmul.f32 %v884, 1.442695
        %v921 = vpow.pop %v920
        %v922 = vmul.f32 %v885, 1.442695
        %v923 = vpow.pop %v922
        %v924 = vmul.f32 %v886, 1.442695
        %v925 = vpow.pop %v924
        %v926 = vmul.f32 %v887, 1.442695
        %v927 = vpow.pop %v926
        %v928 = vmul.f32 %v888, 1.442695
        %v929 = vpow.pop %v928
        %v930 = vmul.f32 %v889, 1.442695
        %v931 = vpow.pop %v930
        %v932 = vmul.f32 %v890, 1.442695
        %v933 = vpow.pop %v932
        %v934 = vmul.f32 %v891, 1.442695
        %v935 = vpow.pop %v934
        %v936 = vmul.f32 %v892, 1.442695
        %v937 = vpow.pop %v936
        %v938 = vmul.f32 %v893, 1.442695
        %v939 = vpow.pop %v938
        %v940 = vmul.f32 %v894, 1.442695
        %v941 = vpow.pop %v940
        %v942 = vmul.f32 %v895, 1.442695
        %v943 = vpow.pop %v942
        %v944 = vmul.f32 %v896, 1.442695
        %v945 = vpow.pop %v944
        %v946 = vmul.f32 %v897, 1.442695
        %v947 = vpow.pop %v946
        %v948 = vmul.f32 %v898, 1.442695
        %v949 = vpow.pop %v948
        %v950 = vmul.f32 %v899, 1.442695
        %v951 = vpow.pop %v950
        %v952 = vmul.f32 %v900, 1.442695
        %v953 = vpow.pop %v952
        %v954 = vmul.f32 %v901, 1.442695
        %v955 = vpow.pop %v954
        %v956 = vmul.f32 %v902, 1.442695
        %v957 = vpow.pop %v956
        %v958 = vmul.f32 %v903, 1.442695
        %v959 = vpow.pop %v958
        %v960 = vmul.f32 %v904, 1.442695
        %v961 = vpow.pop %v960
        %v962 = vmul.f32 %v905, 1.442695
        %v963 = vpow.pop %v962
        %v964 = vmul.f32 %v906, 1.442695
        %v965 = vpow.pop %v964
        %v966 = vmul.f32 %v907, 1.442695
        %v967 = vpow.pop %v966
        %v968 = vmul.f32 %v908, 1.442695
        %v969 = vpow.pop %v968
        %v970 = vmul.f32 %v909, 1.442695
        %v971 = vpow.pop %v970
        %v972 = vmul.f32 %v910, 1.442695
        %v973 = vpow.pop %v972
        %v974 = vmul.f32 %v911, 1.442695
        %v975 = vpow.pop %v974
        %976 = vst [vmem:[%s149] sm:$0xff] %v913
        %977 = vst [vmem:[%s149 + $0x8] sm:$0xff] %v915
        %978 = vst [vmem:[%s149 + $0x10] sm:$0xff] %v917
        %979 = vst [vmem:[%s149 + $0x18] sm:$0xff] %v919
        %980 = vst [vmem:[%s149 + $0x20] sm:$0xff] %v921
        %981 = vst [vmem:[%s149 + $0x28] sm:$0xff] %v923
        %982 = vst [vmem:[%s149 + $0x30] sm:$0xff] %v925
        %983 = vst [vmem:[%s149 + $0x38] sm:$0xff] %v927
        %984 = vst [vmem:[%s149 + $0x40] sm:$0xff] %v929
        %985 = vst [vmem:[%s149 + $0x48] sm:$0xff] %v931
        %986 = vst [vmem:[%s149 + $0x50] sm:$0xff] %v933
        %987 = vst [vmem:[%s149 + $0x58] sm:$0xff] %v935
        %988 = vst [vmem:[%s149 + $0x60] sm:$0xff] %v937
        %989 = vst [vmem:[%s149 + $0x68] sm:$0xff] %v939
        %990 = vst [vmem:[%s149 + $0x70] sm:$0xff] %v941
        %991 = vst [vmem:[%s149 + $0x78] sm:$0xff] %v943
        %992 = vst [vmem:[%s149 + $0x80] sm:$0xff] %v945
        %993 = vst [vmem:[%s149 + $0x88] sm:$0xff] %v947
        %994 = vst [vmem:[%s149 + $0x90] sm:$0xff] %v949
        %995 = vst [vmem:[%s149 + $0x98] sm:$0xff] %v951
        %996 = vst [vmem:[%s149 + $0xa0] sm:$0xff] %v953
        %997 = vst [vmem:[%s149 + $0xa8] sm:$0xff] %v955
        %998 = vst [vmem:[%s149 + $0xb0] sm:$0xff] %v957
        %999 = vst [vmem:[%s149 + $0xb8] sm:$0xff] %v959
        %1000 = vst [vmem:[%s149 + $0xc0] sm:$0xff] %v961
        %1001 = vst [vmem:[%s149 + $0xc8] sm:$0xff] %v963
        %1002 = vst [vmem:[%s149 + $0xd0] sm:$0xff] %v965
        %1003 = vst [vmem:[%s149 + $0xd8] sm:$0xff] %v967
        %1004 = vst [vmem:[%s149 + $0xe0] sm:$0xff] %v969
        %1005 = vst [vmem:[%s149 + $0xe8] sm:$0xff] %v971
        %1006 = vst [vmem:[%s149 + $0xf0] sm:$0xff] %v973
        %1007 = vst [vmem:[%s149 + $0xf8] sm:$0xff] %v975
        %s1008 = sand.u32 %s71, 1
        %s1009 = scalar_lea.sflag [#allocation3], %s1008
        %s1010 = sand.u32 %s71, 1
        %s1011 = smul.addr %s1010, 256
        %s1012 = scalar_lea.vmem [#allocation2], %s1011
        // Predicated region
        $region29: #{tpu_custom_call.1} parent=27 // pred_check
          %p1013 = pneg %p81
        $region30: #{tpu_custom_call.1} parent=27 // pred_check_branch
          %1015 = sbr.rel (%p1013) target = $region32
        $region31: #{tpu_custom_call.1} parent=27 // pred_region
          %s1016 = smul.u32 32, %s16
          %s1017 = ssub.s32 63, %s1016
          %p1018 = scmp.lt.s32.totalorder %s1017, 32
          %s1019 = scalar_select %p1018, %s1017, 32
          %s1020 = smul.u32 8, %s1019
          %s1021 = ssub.s32 256, %s1020
          %s1022 = sshll.u32 %s1021, 4
          %1023 = vsyncadd %s1009, %s1022
          %p1024 = scmp.ne.s32.totalorder 0, %s1020
          %s1025 = smul.addr %s1016, 8
          %s1026 = scalar_lea.hbm %s2, %s1025
          %s1027 = smul.u32 8, %s1019
          %s1028 = sshll.u32 %s1012, 4
          %s1029 = int_to_ptr.vmem [resolvable:$true] %s1028
          %s1030 = sshll.u32 %s1026, 4
          %s1031 = int_to_ptr.hbm [resolvable:$true] %s1030
          %s1032 = sshll.u32 %s1027, 4
          %1036 = dma.vmem_to_hbm [thread:$0]  (%p1024), %s1029, %s1032, %s1031, %s1009, 128, 128, 8
        $region32: #{tpu_custom_call.1} parent=27 // pred_fallthru
          _
      $region28: #{tpu_custom_call.1} parent=5 // pred_fallthru
        _
      %p1037 = scmp.le.s32.totalorder 2, %s11
      // Predicated region
      $region33: #{tpu_custom_call.1} parent=5 // pred_check
        %p1038 = pneg %p1037
      $region34: #{tpu_custom_call.1} parent=5 // pred_check_branch
        %1040 = sbr.rel (%p1038) target = $region36
      $region35: #{tpu_custom_call.1} parent=5 // pred_region
        %s1041 = ssub.s32 %s11, 2
        // Predicated region
        $region37: #{tpu_custom_call.1} parent=35 // pred_check
          %p1042 = pneg %p87
        $region38: #{tpu_custom_call.1} parent=35 // pred_check_branch
          %1044 = sbr.rel (%p1042) target = $region40
        $region39: #{tpu_custom_call.1} parent=35 // pred_region
          %s1045 = sand.u32 %s72, 1
          %s1046 = scalar_lea.sflag [#allocation3], %s1045
          %s1047 = sand.u32 %s72, 1
          %s1048 = smul.addr %s1047, 256
          %s1049 = scalar_lea.vmem [#allocation2], %s1048
          %1051 = dma.done %s1046, 4096
        $region40: #{tpu_custom_call.1} parent=35 // pred_fallthru
          _
      $region36: #{tpu_custom_call.1} parent=5 // pred_fallthru
        _
    $region6: #{tpu_custom_call.1} parent=1 // loop_footer
      %s15 = sadd.s32 1, %s11
    $region7: #{tpu_custom_call.1} parent=1 // loop_footer_branch
      %10 = sbr.rel target = $region3
    $region8: #{tpu_custom_call.1} parent=1 // loop_exit
      _
    %1052 = vsyncpa [#allocation3], 1
    %s1053 = scalar_lea.sflag [#allocation3], 1
    %1054 = vsyncpa %s1053, 1

</llo_original>
